<compile_context>
chip_gen: v5e
topology: v5e:2x2
jax: 0.10.0
libtpu: 0.0.40
codegen_flags: <defaults>
</compile_context>

<pallas_src>
import jax
import jax.numpy as jnp
from jax.experimental import pallas as pl
from jax.experimental.pallas import tpu as pltpu

BN_EPS = 1e-5
MAX_M_TILE = 8192   # lanes per tile; double-buffered VMEM stays a few MiB even at C_out=64


def conv_stats_kernel(patches_ref, w_ref, stats_ref):
    """Pass A: per-tile per-channel sum / sum-of-squares of z = W @ patches (no bias).

    patches: [1, K, m_tile] bf16 (lane-dense), w: [C_out, K] bf16,
    stats: [1, 1, C_out, 2] f32 (one slot per grid step -> fully parallel grid).
    Zero-padded columns contribute exactly 0 to both sums, so no masking is needed.
    """
    z = jnp.dot(w_ref[...], patches_ref[0],
                preferred_element_type=jnp.float32)            # [C_out, m_tile]
    s = jnp.sum(z, axis=1, keepdims=True)
    ss = jnp.sum(z * z, axis=1, keepdims=True)
    stats_ref[0, 0] = jnp.concatenate([s, ss], axis=1)         # single [C_out, 2] store


def conv_bn_elu_kernel(patches_ref, w_ref, ab_ref, o_ref):
    """Pass B: recompute z = W @ patches, apply folded BN (z*scale + shift), then ELU.

    patches: [1, K, m_tile] bf16, w: [C_out, K] bf16, ab: [C_out, 2] f32 (scale, shift),
    o: [1, C_out, m_tile] f32 tile of the [B, C_out, M] output (edge tile lane-masked).
    """
    z = jnp.dot(w_ref[...], patches_ref[0],
                preferred_element_type=jnp.float32)            # [C_out, m_tile]
    zn = z * ab_ref[:, 0:1] + ab_ref[:, 1:2]
    o_ref[0] = jnp.where(zn > 0, zn,
                         jnp.exp(jnp.minimum(zn, 0.0)) - 1.0).astype(o_ref.dtype)


def conv_block_forward(x, weight, bias, gamma, beta):
    """x: [B, C_in, F, T] (NCHW), weight: [C_out, C_in, 3, 2] (OIHW).
    Returns [B, C_out, F-2, (T-2)//2], matching the PyTorch ConvBlock forward."""
    B, C_in, F, T = x.shape
    C_out = weight.shape[0]
    F_out = F - 2                       # kH=3, stride 1, no pad
    T_conv = (T - 2) // 2 + 1           # kW=2, stride 2, no pad
    T_out = T_conv - 1                  # x[:, :, :, :-1] drops last frame
    M = F_out * T_out                   # per-image spatial size after the slice
    N = B * M                           # elements per channel for the batch statistics
    K = C_in * 6

    # --- im2col glue in bf16, laid out [B, K, M] (already in output (b, f, t) order) ---
    # TODO(synk): build the kf/kt taps in-kernel from a 2-row-halo x block to remove this
    #             host-side materialization (~6x the raw-x bytes) entirely.
    xb = x.astype(jnp.bfloat16)
    taps = []
    for kf in range(3):
        for kt in range(2):
            taps.append(xb[:, :, kf:kf + F_out, kt:kt + 2 * T_out:2])
    patches = jnp.stack(taps, axis=2)                    # [B, C_in, 6, F_out, T_out]
    patches = patches.reshape(B, K, M)                   # K order: ci*6 + kf*2 + kt

    # Pad the tiled M axis so every *input* block is full and well-defined (zeros).
    m_tile = min(MAX_M_TILE, ((M + 127) // 128) * 128)
    n_tiles = (M + m_tile - 1) // m_tile
    m_pad = n_tiles * m_tile
    if m_pad != M:
        patches = jnp.pad(patches, ((0, 0), (0, 0), (0, m_pad - M)))

    w2 = weight.reshape(C_out, K).astype(jnp.bfloat16)   # same (ci, kf, kt) flattening

    grid = (B, n_tiles)
    patches_spec = pl.BlockSpec((1, K, m_tile), lambda b, t: (b, 0, t))
    w_spec = pl.BlockSpec((C_out, K), lambda b, t: (0, 0))

    # --- pass A: stats only (per-tile partial sums; both axes megacore-parallel) -------
    stats = pl.pallas_call(
        conv_stats_kernel,
        out_shape=jax.ShapeDtypeStruct((B, n_tiles, C_out, 2), jnp.float32),
        grid=grid,
        in_specs=[patches_spec, w_spec],
        out_specs=pl.BlockSpec((1, 1, C_out, 2), lambda b, t: (b, t, 0, 0)),
        compiler_params=pltpu.CompilerParams(
            dimension_semantics=("parallel", "parallel"),
            vmem_limit_bytes=32 * 1024 * 1024),
    )(patches, w2)

    # --- tiny per-channel BN fold in plain JAX ------------------------------------------
    # Training-mode BN on y = z + bias subtracts mean_y = mean_z + bias, so the conv bias
    # cancels from the forward output and is never applied (`bias` intentionally unused).
    # TODO(synk): PyTorch training-mode BN also updates running_mean/running_var (which
    #             do see the bias); that module-state side effect is not emitted here.
    stat = jnp.sum(stats, axis=(0, 1))                    # [C_out, 2]
    mean = stat[:, 0] / N
    var = jnp.maximum(stat[:, 1] / N - mean * mean, 0.0)  # biased var (training BN)
    scale = gamma.astype(jnp.float32) * jax.lax.rsqrt(var + BN_EPS)
    shift = beta.astype(jnp.float32) - mean * scale
    ab = jnp.stack([scale, shift], axis=1)                # [C_out, 2]

    # --- pass B: recomputed conv + folded BN + ELU, NCHW-layout output ------------------
    out_bcm = pl.pallas_call(
        conv_bn_elu_kernel,
        out_shape=jax.ShapeDtypeStruct((B, C_out, M), jnp.float32),
        grid=grid,
        in_specs=[patches_spec, w_spec,
                  pl.BlockSpec((C_out, 2), lambda b, t: (0, 0))],
        out_specs=pl.BlockSpec((1, C_out, m_tile), lambda b, t: (b, 0, t)),
        compiler_params=pltpu.CompilerParams(
            dimension_semantics=("parallel", "parallel"),
            vmem_limit_bytes=32 * 1024 * 1024),
    )(patches, w2, ab)

    return out_bcm.reshape(B, C_out, F_out, T_out)        # free trailing-dim reshape


if __name__ == "__main__":
    key = jax.random.PRNGKey(0)
    B, C_in, C_out, F, T = 2, 4, 8, 16, 16
    kx, kw, kb = jax.random.split(key, 3)

    x = jax.random.normal(kx, (B, C_in, F, T), dtype=jnp.float32)

    # Deterministic parameter init (PyTorch-like uniform bounds for conv, BN defaults).
    fan_in = C_in * 3 * 2
    bound = 1.0 / (fan_in ** 0.5)
    weight = jax.random.uniform(kw, (C_out, C_in, 3, 2), minval=-bound, maxval=bound,
                                dtype=jnp.float32)
    bias = jax.random.uniform(kb, (C_out,), minval=-bound, maxval=bound, dtype=jnp.float32)
    gamma = jnp.ones((C_out,), jnp.float32)
    beta = jnp.zeros((C_out,), jnp.float32)

    out = jax.jit(conv_block_forward)(x, weight, bias, gamma, beta)
    out = jax.block_until_ready(out)

    # Plain-JAX f32 reference for the module's forward semantics.
    ref = jax.lax.conv_general_dilated(x, weight, (1, 2), "VALID",
                                       dimension_numbers=("NCHW", "OIHW", "NCHW"))
    ref = ref + bias.reshape(1, C_out, 1, 1)
    ref = ref[:, :, :, :-1]
    m = ref.mean(axis=(0, 2, 3), keepdims=True)
    v = ((ref - m) ** 2).mean(axis=(0, 2, 3), keepdims=True)
    refn = (ref - m) / jnp.sqrt(v + BN_EPS) * gamma.reshape(1, C_out, 1, 1) \
        + beta.reshape(1, C_out, 1, 1)
    ref_out = jnp.where(refn > 0, refn, jnp.exp(jnp.minimum(refn, 0.0)) - 1.0)

    assert out.shape == (B, C_out, F - 2, (T - 2) // 2)
    # bf16 matmul inputs -> slightly looser tolerance than pure-f32.
    assert jnp.allclose(out, ref_out, atol=2e-2, rtol=2e-2), "kernel/reference mismatch"
    print("KERNEL_OK")
</pallas_src>

<mosaic_0001>
module attributes {stable_mosaic.version = 11 : i64} {
  func.func @conv_stats_kernel(%arg0: i32, %arg1: i32, %arg2: memref<1x24x128xbf16, #tpu.memory_space<vmem>>, %arg3: memref<8x24xbf16, #tpu.memory_space<vmem>>, %arg4: memref<1x1x8x2xf32, #tpu.memory_space<vmem>>) attributes {dimension_semantics = [#tpu.dimension_semantics<parallel>, #tpu.dimension_semantics<parallel>], iteration_bounds = array<i64: 2, 1>, scalar_prefetch = 0 : i64, scratch_operands = 0 : i64, tpu.core_type = #tpu.core_type<tc>, window_params = [{transform_indices = @transform_0, window_bounds = array<i64: 1, 24, 128>}, {pipeline_mode = #tpu.pipeline_mode<synchronous>, transform_indices = @transform_1, window_bounds = array<i64: 8, 24>}, {transform_indices = @transform_2, window_bounds = array<i64: 1, 1, 8, 2>}]} {
    %c0 = arith.constant 0 : index
    %c0_0 = arith.constant 0 : index
    %0 = vector.load %arg3[%c0, %c0_0] : memref<8x24xbf16, #tpu.memory_space<vmem>>, vector<8x24xbf16>
    %c0_1 = arith.constant 0 : index
    %c0_2 = arith.constant 0 : index
    %c0_3 = arith.constant 0 : index
    %1 = vector.load %arg2[%c0_1, %c0_2, %c0_3] : memref<1x24x128xbf16, #tpu.memory_space<vmem>>, vector<1x24x128xbf16>
    %2 = vector.shape_cast %1 : vector<1x24x128xbf16> to vector<24x128xbf16>
    %cst = arith.constant dense<0.000000e+00> : vector<8x128xf32>
    %3 = tpu.matmul %0, %2, %cst {dimension_numbers = #tpu.dot_dimension_numbers<[1], [0], [0], [1], [0, 0, 1, 1], [], []>} : vector<8x24xbf16>, vector<24x128xbf16>, vector<8x128xf32> -> vector<8x128xf32>
    %cst_4 = arith.constant dense<0.000000e+00> : vector<8xf32>
    %4 = vector.multi_reduction <add>, %3, %cst_4 [1] : vector<8x128xf32> to vector<8xf32>
    %5 = vector.shape_cast %4 : vector<8xf32> to vector<8x1xf32>
    %6 = arith.mulf %3, %3 : vector<8x128xf32>
    %cst_5 = arith.constant dense<0.000000e+00> : vector<8xf32>
    %7 = vector.multi_reduction <add>, %6, %cst_5 [1] : vector<8x128xf32> to vector<8xf32>
    %8 = vector.shape_cast %7 : vector<8xf32> to vector<8x1xf32>
    %9 = tpu.concatenate %5, %8 in 1 : vector<8x1xf32>, vector<8x1xf32> -> vector<8x2xf32>
    %c0_6 = arith.constant 0 : index
    %c0_7 = arith.constant 0 : index
    %c0_8 = arith.constant 0 : index
    %c0_9 = arith.constant 0 : index
    %10 = vector.load %arg4[%c0_6, %c0_7, %c0_8, %c0_9] : memref<1x1x8x2xf32, #tpu.memory_space<vmem>>, vector<1x1x8x2xf32>
    %11 = vector.shape_cast %10 : vector<1x1x8x2xf32> to vector<8x2xf32>
    %12 = vector.shape_cast %9 : vector<8x2xf32> to vector<1x1x8x2xf32>
    tpu.vector_store %arg4[%c0_6, %c0_7, %c0_8, %c0_9], %12 {strides = array<i32>} : memref<1x1x8x2xf32, #tpu.memory_space<vmem>>, vector<1x1x8x2xf32>,
    return
  }
  func.func @transform_0(%arg0: i32, %arg1: i32) -> (i32, i32, i32) {
    %c0_i32 = arith.constant 0 : i32
    %c0_i32_0 = arith.constant 0 : i32
    return %arg0, %c0_i32, %arg1 : i32, i32, i32
  }
  func.func @transform_1(%arg0: i32, %arg1: i32) -> (i32, i32) {
    %c0_i32 = arith.constant 0 : i32
    %c0_i32_0 = arith.constant 0 : i32
    %c0_i32_1 = arith.constant 0 : i32
    return %c0_i32, %c0_i32_0 : i32, i32
  }
  func.func @transform_2(%arg0: i32, %arg1: i32) -> (i32, i32, i32, i32) {
    %c0_i32 = arith.constant 0 : i32
    %c0_i32_0 = arith.constant 0 : i32
    %c0_i32_1 = arith.constant 0 : i32
    return %arg0, %arg1, %c0_i32, %c0_i32_0 : i32, i32, i32, i32
  }
}

module attributes {stable_mosaic.version = 11 : i64} {
  func.func @conv_bn_elu_kernel(%arg0: i32, %arg1: i32, %arg2: memref<1x24x128xbf16, #tpu.memory_space<vmem>>, %arg3: memref<8x24xbf16, #tpu.memory_space<vmem>>, %arg4: memref<8x2xf32, #tpu.memory_space<vmem>>, %arg5: memref<1x8x128xf32, #tpu.memory_space<vmem>>) attributes {dimension_semantics = [#tpu.dimension_semantics<parallel>, #tpu.dimension_semantics<parallel>], iteration_bounds = array<i64: 2, 1>, scalar_prefetch = 0 : i64, scratch_operands = 0 : i64, tpu.core_type = #tpu.core_type<tc>, window_params = [{transform_indices = @transform_0, window_bounds = array<i64: 1, 24, 128>}, {pipeline_mode = #tpu.pipeline_mode<synchronous>, transform_indices = @transform_1, window_bounds = array<i64: 8, 24>}, {pipeline_mode = #tpu.pipeline_mode<synchronous>, transform_indices = @transform_2, window_bounds = array<i64: 8, 2>}, {transform_indices = @transform_3, window_bounds = array<i64: 1, 8, 128>}]} {
    %c0 = arith.constant 0 : index
    %c0_0 = arith.constant 0 : index
    %0 = vector.load %arg3[%c0, %c0_0] : memref<8x24xbf16, #tpu.memory_space<vmem>>, vector<8x24xbf16>
    %c0_1 = arith.constant 0 : index
    %c0_2 = arith.constant 0 : index
    %c0_3 = arith.constant 0 : index
    %1 = vector.load %arg2[%c0_1, %c0_2, %c0_3] : memref<1x24x128xbf16, #tpu.memory_space<vmem>>, vector<1x24x128xbf16>
    %2 = vector.shape_cast %1 : vector<1x24x128xbf16> to vector<24x128xbf16>
    %cst = arith.constant dense<0.000000e+00> : vector<8x128xf32>
    %3 = tpu.matmul %0, %2, %cst {dimension_numbers = #tpu.dot_dimension_numbers<[1], [0], [0], [1], [0, 0, 1, 1], [], []>} : vector<8x24xbf16>, vector<24x128xbf16>, vector<8x128xf32> -> vector<8x128xf32>
    %c0_4 = arith.constant 0 : index
    %c0_5 = arith.constant 0 : index
    %4 = vector.load %arg4[%c0_4, %c0_5] : memref<8x2xf32, #tpu.memory_space<vmem>>, vector<8x1xf32>
    %5 = vector.broadcast %4 : vector<8x1xf32> to vector<8x128xf32>
    %6 = arith.mulf %3, %5 : vector<8x128xf32>
    %c0_6 = arith.constant 0 : index
    %c1 = arith.constant 1 : index
    %7 = vector.load %arg4[%c0_6, %c1] : memref<8x2xf32, #tpu.memory_space<vmem>>, vector<8x1xf32>
    %8 = vector.broadcast %7 : vector<8x1xf32> to vector<8x128xf32>
    %9 = arith.addf %6, %8 : vector<8x128xf32>
    %cst_7 = arith.constant 0.000000e+00 : f32
    %10 = vector.broadcast %cst_7 : f32 to vector<8x128xf32>
    %11 = arith.cmpf ogt, %9, %10 : vector<8x128xf32>
    %cst_8 = arith.constant 0.000000e+00 : f32
    %12 = vector.broadcast %cst_8 : f32 to vector<8x128xf32>
    %13 = arith.minimumf %9, %12 : vector<8x128xf32>
    %14 = math.exp %13 : vector<8x128xf32>
    %cst_9 = arith.constant 1.000000e+00 : f32
    %15 = vector.broadcast %cst_9 : f32 to vector<8x128xf32>
    %16 = arith.subf %14, %15 : vector<8x128xf32>
    %17 = arith.select %11, %9, %16 : vector<8x128xi1>, vector<8x128xf32>
    %c0_10 = arith.constant 0 : index
    %c0_11 = arith.constant 0 : index
    %c0_12 = arith.constant 0 : index
    %18 = vector.load %arg5[%c0_10, %c0_11, %c0_12] : memref<1x8x128xf32, #tpu.memory_space<vmem>>, vector<1x8x128xf32>
    %19 = vector.shape_cast %18 : vector<1x8x128xf32> to vector<8x128xf32>
    %20 = vector.shape_cast %17 : vector<8x128xf32> to vector<1x8x128xf32>
    tpu.vector_store %arg5[%c0_10, %c0_11, %c0_12], %20 {strides = array<i32>} : memref<1x8x128xf32, #tpu.memory_space<vmem>>, vector<1x8x128xf32>,
    return
  }
  func.func @transform_0(%arg0: i32, %arg1: i32) -> (i32, i32, i32) {
    %c0_i32 = arith.constant 0 : i32
    %c0_i32_0 = arith.constant 0 : i32
    return %arg0, %c0_i32, %arg1 : i32, i32, i32
  }
  func.func @transform_1(%arg0: i32, %arg1: i32) -> (i32, i32) {
    %c0_i32 = arith.constant 0 : i32
    %c0_i32_0 = arith.constant 0 : i32
    %c0_i32_1 = arith.constant 0 : i32
    return %c0_i32, %c0_i32_0 : i32, i32
  }
  func.func @transform_2(%arg0: i32, %arg1: i32) -> (i32, i32) {
    %c0_i32 = arith.constant 0 : i32
    %c0_i32_0 = arith.constant 0 : i32
    %c0_i32_1 = arith.constant 0 : i32
    return %c0_i32, %c0_i32_0 : i32, i32
  }
  func.func @transform_3(%arg0: i32, %arg1: i32) -> (i32, i32, i32) {
    %c0_i32 = arith.constant 0 : i32
    %c0_i32_0 = arith.constant 0 : i32
    return %arg0, %c0_i32, %arg1 : i32, i32, i32
  }
}

</mosaic_0001>

<llo_original>
// kernel: conv_block_forward.2
$region0: #{conv_block_forward.2}
  #allocation0 [shape = 'u32[]', space=smem, size = 0x4, offset = 0x4, fixed_abs, tag = 'smem constant byte address 0x4 - core index']
  #allocation1 [shape = 'u32[72,128]{1,0:T(1,128)}', space=vmem, size = 0x9000, scoped, tag = 'internal scratch']
  %s0 = inlined_call_operand.vmem [shape: bf16[2,24,128], index: 0, kind: input, shape index: {}]
  %s1 = inlined_call_operand.vmem [shape: bf16[8,24], index: 1, kind: input, shape index: {}]
  %s2 = inlined_call_operand.vmem [shape: f32[2,1,8,2], index: 2, kind: output, shape index: {}]
  %s3 = sld [smem:[#allocation0]]
  $region41: #{conv_block_forward.2} parent=0
    _
  %s5 = ssub.s32 1, %s3
  %s6 = scalar_select 0, %s5, %s3
  loop: start=0, step=1, limit=4
  $region2: #{conv_block_forward.2} parent=0 // loop_pre_header
    _
  $region3: #{conv_block_forward.2} parent=0 // loop_header
    %s8 = sphi 0, %s12
    %p9 = scmp.ge.s32.totalorder %s8, 4
    %s15 = sphi 0, %s27
    %s16 = sphi 0, %s23
    %s17 = sphi 0, %s15
    %s18 = sphi 0, %s16
    %s19 = sphi 0, %s17
    %s20 = sphi 0, %s18
    %s32 = sphi 0, %s34
    %s35 = sphi 0, %s32
    %s36 = sphi 0, %s35
    %s52 = sphi 0, %s36
    %s56 = sphi 0, %s56
    %s58 = sphi 0, %s56
    %s59 = sphi 0, %s58
    %s73 = sphi 0, %s59
    %s81 = sphi 0, %s83
    %s84 = sphi 0, %s81
    %s85 = sphi 0, %s84
    %s101 = sphi 0, %s85
  $region4: #{conv_block_forward.2} parent=0 // loop_header_branch
    %11 = sbr.rel (%p9) target = $region8
  $region5: #{conv_block_forward.2} parent=0 // loop_body
    %s13 = ssub.s32 %s8, 1
    %s14 = ssub.s32 %s8, 2
    %s21 = sadd.s32 1, %s16
    %p22 = scmp.ge.s32.totalorder %s21, 1
    %s23 = scalar_select %p22, 0, %s21
    %s24 = sadd.s32 1, %s15
    %s25 = scalar_select %p22, %s24, %s15
    %p26 = scmp.ge.s32.totalorder %s25, 2
    %s27 = scalar_select %p26, 0, %s25
    %s28 = ssub.s32 %s15, %s27
    %s29 = ssub.s32 %s16, %s23
    %s30 = sor.u32 %s28, %s29
    %p31 = scmp.eq.s32.totalorder %s30, 0
    %s33 = sadd.s32 %s32, 1
    %s34 = scalar_select %p31, %s32, %s33
    %p37 = pneg %p31
    %p38 = scmp.eq.s32.totalorder %s8, 1
    %p39 = por %p37, %p38
    %p40 = scmp.ne.s32.totalorder %s32, %s35
    %p41 = scmp.eq.s32.totalorder %s8, 0
    %p42 = por %p40, %p41
    %p43 = scmp.ne.s32.totalorder %s32, %s35
    %p44 = scmp.eq.s32.totalorder %s13, 1
    %p45 = por %p43, %p44
    %p46 = scmp.ne.s32.totalorder %s35, %s36
    %p47 = scmp.eq.s32.totalorder %s13, 0
    %p48 = por %p46, %p47
    %p49 = scmp.ne.s32.totalorder %s35, %s36
    %p50 = scmp.eq.s32.totalorder %s14, 1
    %p51 = por %p49, %p50
    %p53 = scmp.ne.s32.totalorder %s36, %s52
    %p54 = scmp.eq.s32.totalorder %s14, 0
    %p55 = por %p53, %p54
    %s57 = sadd.s32 %s56, 1
    %p60 = scmp.eq.s32.totalorder %s8, 1
    %p61 = scmp.ne.s32.totalorder %s56, %s58
    %p62 = scmp.eq.s32.totalorder %s8, 0
    %p63 = por %p61, %p62
    %p64 = scmp.ne.s32.totalorder %s56, %s58
    %p65 = scmp.eq.s32.totalorder %s13, 1
    %p66 = por %p64, %p65
    %p67 = scmp.ne.s32.totalorder %s58, %s59
    %p68 = scmp.eq.s32.totalorder %s13, 0
    %p69 = por %p67, %p68
    %p70 = scmp.ne.s32.totalorder %s58, %s59
    %p71 = scmp.eq.s32.totalorder %s14, 1
    %p72 = por %p70, %p71
    %p74 = scmp.ne.s32.totalorder %s59, %s73
    %p75 = scmp.eq.s32.totalorder %s14, 0
    %p76 = por %p74, %p75
    %s77 = ssub.s32 %s15, %s27
    %s78 = ssub.s32 %s16, %s23
    %s79 = sor.u32 %s77, %s78
    %p80 = scmp.eq.s32.totalorder %s79, 0
    %s82 = sadd.s32 %s81, 1
    %s83 = scalar_select %p80, %s81, %s82
    %p86 = pneg %p80
    %p87 = scmp.eq.s32.totalorder %s8, 1
    %p88 = por %p86, %p87
    %p89 = scmp.ne.s32.totalorder %s81, %s84
    %p90 = scmp.eq.s32.totalorder %s8, 0
    %p91 = por %p89, %p90
    %p92 = scmp.ne.s32.totalorder %s81, %s84
    %p93 = scmp.eq.s32.totalorder %s13, 1
    %p94 = por %p92, %p93
    %p95 = scmp.ne.s32.totalorder %s84, %s85
    %p96 = scmp.eq.s32.totalorder %s13, 0
    %p97 = por %p95, %p96
    %p98 = scmp.ne.s32.totalorder %s84, %s85
    %p99 = scmp.eq.s32.totalorder %s14, 1
    %p100 = por %p98, %p99
    %p102 = scmp.ne.s32.totalorder %s85, %s101
    %p103 = scmp.eq.s32.totalorder %s14, 0
    %p104 = por %p102, %p103
    %p105 = scmp.le.s32.totalorder 1, %s8
    %p106 = scmp.lt.s32.totalorder %s8, 3
    %p107 = pnand %p105, %p106
    %p108 = pneg %p107
    // Predicated region
    $region9: #{conv_block_forward.2} parent=5 // pred_check
      _
    $region10: #{conv_block_forward.2} parent=5 // pred_check_branch
      %110 = sbr.rel (%p107) target = $region12
    $region11: #{conv_block_forward.2} parent=5 // pred_region
      %s111 = ssub.s32 %s8, 1
      // Predicated region
      $region13: #{conv_block_forward.2} parent=11 // pred_check
        %p112 = pneg %p69
      $region14: #{conv_block_forward.2} parent=11 // pred_check_branch
        %114 = sbr.rel (%p112) target = $region16
      $region15: #{conv_block_forward.2} parent=11 // pred_region
        _
      $region16: #{conv_block_forward.2} parent=11 // pred_fallthru
        _
    $region12: #{conv_block_forward.2} parent=5 // pred_fallthru
      _
    %p115 = scmp.lt.s32.totalorder %s8, 2
    // Predicated region
    $region17: #{conv_block_forward.2} parent=5 // pred_check
      %p116 = pneg %p115
    $region18: #{conv_block_forward.2} parent=5 // pred_check_branch
      %118 = sbr.rel (%p116) target = $region20
    $region19: #{conv_block_forward.2} parent=5 // pred_region
      // Predicated region
      $region21: #{conv_block_forward.2} parent=19 // pred_check
        %p119 = pneg %p42
      $region22: #{conv_block_forward.2} parent=19 // pred_check_branch
        %121 = sbr.rel (%p119) target = $region24
      $region23: #{conv_block_forward.2} parent=19 // pred_region
        %p122 = scmp.lt.s32.totalorder %s15, 1
        %s123 = scalar_select %p122, %s15, 1
        %p124 = scmp.lt.s32.totalorder %s16, 0
        %s125 = scalar_select %p124, %s16, 0
        %s126 = smul.addr %s123, 3
        %s127 = sadd.s32 %s125, %s126
        %s128 = smul.addr %s127, 4
        %s129 = scalar_lea.vmem %s0, %s128
      $region24: #{conv_block_forward.2} parent=19 // pred_fallthru
        _
    $region20: #{conv_block_forward.2} parent=5 // pred_fallthru
      _
    %p130 = scmp.le.s32.totalorder 1, %s8
    %p131 = scmp.lt.s32.totalorder %s8, 3
    %p132 = pnand %p130, %p131
    %p133 = pneg %p132
    // Predicated region
    $region25: #{conv_block_forward.2} parent=5 // pred_check
      _
    $region26: #{conv_block_forward.2} parent=5 // pred_check_branch
      %135 = sbr.rel (%p132) target = $region28
    $region27: #{conv_block_forward.2} parent=5 // pred_region
      %s136 = ssub.s32 %s8, 1
      %p137 = scmp.lt.s32.totalorder %s17, 1
      %s138 = scalar_select %p137, %s17, 1
      %p139 = scmp.lt.s32.totalorder %s18, 0
      %s140 = scalar_select %p139, %s18, 0
      %s141 = smul.addr %s138, 3
      %s142 = sadd.s32 %s140, %s141
      %s143 = smul.addr %s142, 4
      %s144 = scalar_lea.vmem %s0, %s143
      %p145 = pneg %p48
      %p146 = pneg %p45
      %p147 = pneg %p69
      %p148 = pneg %p66
      %p149 = pneg %p97
      %p150 = pneg %p94
      %p151 = scmp.lt.s32.totalorder %s17, 1
      %s152 = scalar_select %p151, %s17, 1
      %p153 = scmp.lt.s32.totalorder %s18, 0
      %s154 = scalar_select %p153, %s18, 0
      %s155 = sadd.s32 %s154, %s152
      %s156 = smul.addr %s155, 8
      %s157 = scalar_lea.vmem %s2, %s156
      %p158 = scmp.lt.s32.totalorder %s17, 1
      %s159 = scalar_select %p158, %s17, 1
      %p160 = scmp.lt.s32.totalorder %s18, 0
      %s161 = scalar_select %p160, %s18, 0
      %s162 = smul.addr %s159, 3
      %s163 = sadd.s32 %s161, %s162
      %s164 = smul.addr %s163, 4
      %s165 = scalar_lea.vmem %s0, %s164
      %p166 = scmp.lt.s32.totalorder %s17, 1
      %s167 = scalar_select %p166, %s17, 1
      %p168 = scmp.lt.s32.totalorder %s18, 0
      %s169 = scalar_select %p168, %s18, 0
      %s170 = sadd.s32 %s169, %s167
      %s171 = smul.addr %s170, 8
      %s172 = scalar_lea.vmem %s2, %s171
      %v174 = vld [vmem:[%s1] sm:$0xf]
      %v175 = vld [vmem:[%s165] sm:$0xf]
      %v176 = vld [vmem:[%s165 + $0x4] sm:$0xf]
      %v177 = vld [vmem:[%s165 + $0x8] sm:$0xf]
      %v181 = vunpack.c.l.b16 %v175
      %v182 = vunpack.c.l.b16 %v176
      %v183 = vunpack.c.l.b16 %v177
      %v184 = vpack.c.b16 %v182, %v181
      %v185 = vpack.c.b16 %v183, %v183
      %vm187 = vcmask 195584
      %v189 = vsel %vm187, %v174, 0
      %vm191 = vcmask 1043456
      %v193 = vsel %vm191, %v185, 0
      %195 = vmatpush.bf16.msra.mxu0 0
      %196 = vmatpush.bf16.msra.mxu0 0
      %197 = vmatpush.bf16.msra.mxu0 0
      %198 = vmatpush.bf16.msra.mxu0 0
      %199 = vmatpush.bf16.msra.mxu0 0
      %200 = vmatpush.bf16.msra.mxu0 0
      %201 = vmatpush.bf16.msra.mxu0 %v193
      %202 = vmatpush.bf16.msra.mxu0 %v184
      %203 = vmatmul.bf16.gmra.mxu0 %v189
      %v204 = vpop.f32.mrf.mxu0
      %v205 = vadd.f32 0.0, %v204
      %v206 = vpop.f32.mrf.mxu0
      %207 = vdwg.mxu0
      %208 = vadd.xlane.f32.xlu0 %v205
      %v209 = vpop.xlane.xlu0 %208
      %v210 = vmul.f32 %v205, %v205
      %211 = vadd.xlane.f32.xlu0 %v210
      %v212 = vpop.xlane.xlu0 %211
      %vm213 = vcmask 7168
      %v214 = vsel %vm213, %v209, %v212
      %vm215 = vcmask 15360
      %216 = vst.msk [vmem:[%s172] sm:$0xff] %vm215, %v214
      %p217 = scmp.lt.s32.totalorder %s17, 1
      %s218 = scalar_select %p217, %s17, 1
      %p219 = scmp.lt.s32.totalorder %s18, 0
      %s220 = scalar_select %p219, %s18, 0
      %s221 = sadd.s32 %s220, %s218
      %s222 = smul.addr %s221, 8
      %s223 = scalar_lea.vmem %s2, %s222
      // Predicated region
      $region29: #{conv_block_forward.2} parent=27 // pred_check
        %p224 = pneg %p94
      $region30: #{conv_block_forward.2} parent=27 // pred_check_branch
        %226 = sbr.rel (%p224) target = $region32
      $region31: #{conv_block_forward.2} parent=27 // pred_region
        _
      $region32: #{conv_block_forward.2} parent=27 // pred_fallthru
        _
    $region28: #{conv_block_forward.2} parent=5 // pred_fallthru
      _
    %p227 = scmp.le.s32.totalorder 2, %s8
    // Predicated region
    $region33: #{conv_block_forward.2} parent=5 // pred_check
      %p228 = pneg %p227
    $region34: #{conv_block_forward.2} parent=5 // pred_check_branch
      %230 = sbr.rel (%p228) target = $region36
    $region35: #{conv_block_forward.2} parent=5 // pred_region
      %s231 = ssub.s32 %s8, 2
      // Predicated region
      $region37: #{conv_block_forward.2} parent=35 // pred_check
        %p232 = pneg %p100
      $region38: #{conv_block_forward.2} parent=35 // pred_check_branch
        %234 = sbr.rel (%p232) target = $region40
      $region39: #{conv_block_forward.2} parent=35 // pred_region
        %p235 = scmp.lt.s32.totalorder %s19, 1
        %s236 = scalar_select %p235, %s19, 1
        %p237 = scmp.lt.s32.totalorder %s20, 0
        %s238 = scalar_select %p237, %s20, 0
        %s239 = sadd.s32 %s238, %s236
        %s240 = smul.addr %s239, 8
        %s241 = scalar_lea.vmem %s2, %s240
      $region40: #{conv_block_forward.2} parent=35 // pred_fallthru
        _
    $region36: #{conv_block_forward.2} parent=5 // pred_fallthru
      _
  $region6: #{conv_block_forward.2} parent=0 // loop_footer
    %s12 = sadd.s32 1, %s8
  $region7: #{conv_block_forward.2} parent=0 // loop_footer_branch
    %7 = sbr.rel target = $region3
  $region8: #{conv_block_forward.2} parent=0 // loop_exit
    _

// kernel: conv_block_forward.3
$region0: #{conv_block_forward.3}
  #allocation0 [shape = 'u32[]', space=smem, size = 0x4, offset = 0x4, fixed_abs, tag = 'smem constant byte address 0x4 - core index']
  #allocation1 [shape = 'u32[72,128]{1,0:T(1,128)}', space=vmem, size = 0x9000, scoped, tag = 'internal scratch']
  %s0 = inlined_call_operand.vmem [shape: bf16[2,24,128], index: 0, kind: input, shape index: {}]
  %s1 = inlined_call_operand.vmem [shape: bf16[8,24], index: 1, kind: input, shape index: {}]
  %s2 = inlined_call_operand.vmem [shape: f32[8,2], index: 2, kind: input, shape index: {}]
  %s3 = inlined_call_operand.vmem [shape: f32[2,8,98], index: 3, kind: output, shape index: {}]
  %s4 = sld [smem:[#allocation0]]
  $region45: #{conv_block_forward.3} parent=0
    _
  %s6 = ssub.s32 1, %s4
  %s7 = scalar_select 0, %s6, %s4
  loop: start=0, step=1, limit=4
  $region2: #{conv_block_forward.3} parent=0 // loop_pre_header
    _
  $region3: #{conv_block_forward.3} parent=0 // loop_header
    %s9 = sphi 0, %s13
    %p10 = scmp.ge.s32.totalorder %s9, 4
    %s16 = sphi 0, %s28
    %s17 = sphi 0, %s24
    %s18 = sphi 0, %s16
    %s19 = sphi 0, %s17
    %s20 = sphi 0, %s18
    %s21 = sphi 0, %s19
    %s33 = sphi 0, %s35
    %s36 = sphi 0, %s33
    %s37 = sphi 0, %s36
    %s53 = sphi 0, %s37
    %s57 = sphi 0, %s57
    %s59 = sphi 0, %s57
    %s60 = sphi 0, %s59
    %s74 = sphi 0, %s60
    %s78 = sphi 0, %s78
    %s80 = sphi 0, %s78
    %s81 = sphi 0, %s80
    %s95 = sphi 0, %s81
    %s103 = sphi 0, %s105
    %s106 = sphi 0, %s103
    %s107 = sphi 0, %s106
    %s123 = sphi 0, %s107
  $region4: #{conv_block_forward.3} parent=0 // loop_header_branch
    %12 = sbr.rel (%p10) target = $region8
  $region5: #{conv_block_forward.3} parent=0 // loop_body
    %s14 = ssub.s32 %s9, 1
    %s15 = ssub.s32 %s9, 2
    %s22 = sadd.s32 1, %s17
    %p23 = scmp.ge.s32.totalorder %s22, 1
    %s24 = scalar_select %p23, 0, %s22
    %s25 = sadd.s32 1, %s16
    %s26 = scalar_select %p23, %s25, %s16
    %p27 = scmp.ge.s32.totalorder %s26, 2
    %s28 = scalar_select %p27, 0, %s26
    %s29 = ssub.s32 %s16, %s28
    %s30 = ssub.s32 %s17, %s24
    %s31 = sor.u32 %s29, %s30
    %p32 = scmp.eq.s32.totalorder %s31, 0
    %s34 = sadd.s32 %s33, 1
    %s35 = scalar_select %p32, %s33, %s34
    %p38 = pneg %p32
    %p39 = scmp.eq.s32.totalorder %s9, 1
    %p40 = por %p38, %p39
    %p41 = scmp.ne.s32.totalorder %s33, %s36
    %p42 = scmp.eq.s32.totalorder %s9, 0
    %p43 = por %p41, %p42
    %p44 = scmp.ne.s32.totalorder %s33, %s36
    %p45 = scmp.eq.s32.totalorder %s14, 1
    %p46 = por %p44, %p45
    %p47 = scmp.ne.s32.totalorder %s36, %s37
    %p48 = scmp.eq.s32.totalorder %s14, 0
    %p49 = por %p47, %p48
    %p50 = scmp.ne.s32.totalorder %s36, %s37
    %p51 = scmp.eq.s32.totalorder %s15, 1
    %p52 = por %p50, %p51
    %p54 = scmp.ne.s32.totalorder %s37, %s53
    %p55 = scmp.eq.s32.totalorder %s15, 0
    %p56 = por %p54, %p55
    %s58 = sadd.s32 %s57, 1
    %p61 = scmp.eq.s32.totalorder %s9, 1
    %p62 = scmp.ne.s32.totalorder %s57, %s59
    %p63 = scmp.eq.s32.totalorder %s9, 0
    %p64 = por %p62, %p63
    %p65 = scmp.ne.s32.totalorder %s57, %s59
    %p66 = scmp.eq.s32.totalorder %s14, 1
    %p67 = por %p65, %p66
    %p68 = scmp.ne.s32.totalorder %s59, %s60
    %p69 = scmp.eq.s32.totalorder %s14, 0
    %p70 = por %p68, %p69
    %p71 = scmp.ne.s32.totalorder %s59, %s60
    %p72 = scmp.eq.s32.totalorder %s15, 1
    %p73 = por %p71, %p72
    %p75 = scmp.ne.s32.totalorder %s60, %s74
    %p76 = scmp.eq.s32.totalorder %s15, 0
    %p77 = por %p75, %p76
    %s79 = sadd.s32 %s78, 1
    %p82 = scmp.eq.s32.totalorder %s9, 1
    %p83 = scmp.ne.s32.totalorder %s78, %s80
    %p84 = scmp.eq.s32.totalorder %s9, 0
    %p85 = por %p83, %p84
    %p86 = scmp.ne.s32.totalorder %s78, %s80
    %p87 = scmp.eq.s32.totalorder %s14, 1
    %p88 = por %p86, %p87
    %p89 = scmp.ne.s32.totalorder %s80, %s81
    %p90 = scmp.eq.s32.totalorder %s14, 0
    %p91 = por %p89, %p90
    %p92 = scmp.ne.s32.totalorder %s80, %s81
    %p93 = scmp.eq.s32.totalorder %s15, 1
    %p94 = por %p92, %p93
    %p96 = scmp.ne.s32.totalorder %s81, %s95
    %p97 = scmp.eq.s32.totalorder %s15, 0
    %p98 = por %p96, %p97
    %s99 = ssub.s32 %s16, %s28
    %s100 = ssub.s32 %s17, %s24
    %s101 = sor.u32 %s99, %s100
    %p102 = scmp.eq.s32.totalorder %s101, 0
    %s104 = sadd.s32 %s103, 1
    %s105 = scalar_select %p102, %s103, %s104
    %p108 = pneg %p102
    %p109 = scmp.eq.s32.totalorder %s9, 1
    %p110 = por %p108, %p109
    %p111 = scmp.ne.s32.totalorder %s103, %s106
    %p112 = scmp.eq.s32.totalorder %s9, 0
    %p113 = por %p111, %p112
    %p114 = scmp.ne.s32.totalorder %s103, %s106
    %p115 = scmp.eq.s32.totalorder %s14, 1
    %p116 = por %p114, %p115
    %p117 = scmp.ne.s32.totalorder %s106, %s107
    %p118 = scmp.eq.s32.totalorder %s14, 0
    %p119 = por %p117, %p118
    %p120 = scmp.ne.s32.totalorder %s106, %s107
    %p121 = scmp.eq.s32.totalorder %s15, 1
    %p122 = por %p120, %p121
    %p124 = scmp.ne.s32.totalorder %s107, %s123
    %p125 = scmp.eq.s32.totalorder %s15, 0
    %p126 = por %p124, %p125
    %p127 = scmp.le.s32.totalorder 1, %s9
    %p128 = scmp.lt.s32.totalorder %s9, 3
    %p129 = pnand %p127, %p128
    %p130 = pneg %p129
    // Predicated region
    $region9: #{conv_block_forward.3} parent=5 // pred_check
      _
    $region10: #{conv_block_forward.3} parent=5 // pred_check_branch
      %132 = sbr.rel (%p129) target = $region12
    $region11: #{conv_block_forward.3} parent=5 // pred_region
      %s133 = ssub.s32 %s9, 1
      // Predicated region
      $region13: #{conv_block_forward.3} parent=11 // pred_check
        %p134 = pneg %p70
      $region14: #{conv_block_forward.3} parent=11 // pred_check_branch
        %136 = sbr.rel (%p134) target = $region16
      $region15: #{conv_block_forward.3} parent=11 // pred_region
        _
      $region16: #{conv_block_forward.3} parent=11 // pred_fallthru
        _
      // Predicated region
      $region17: #{conv_block_forward.3} parent=11 // pred_check
        %p137 = pneg %p91
      $region18: #{conv_block_forward.3} parent=11 // pred_check_branch
        %139 = sbr.rel (%p137) target = $region20
      $region19: #{conv_block_forward.3} parent=11 // pred_region
        _
      $region20: #{conv_block_forward.3} parent=11 // pred_fallthru
        _
    $region12: #{conv_block_forward.3} parent=5 // pred_fallthru
      _
    %p140 = scmp.lt.s32.totalorder %s9, 2
    // Predicated region
    $region21: #{conv_block_forward.3} parent=5 // pred_check
      %p141 = pneg %p140
    $region22: #{conv_block_forward.3} parent=5 // pred_check_branch
      %143 = sbr.rel (%p141) target = $region24
    $region23: #{conv_block_forward.3} parent=5 // pred_region
      // Predicated region
      $region25: #{conv_block_forward.3} parent=23 // pred_check
        %p144 = pneg %p43
      $region26: #{conv_block_forward.3} parent=23 // pred_check_branch
        %146 = sbr.rel (%p144) target = $region28
      $region27: #{conv_block_forward.3} parent=23 // pred_region
        %p147 = scmp.lt.s32.totalorder %s16, 1
        %s148 = scalar_select %p147, %s16, 1
        %p149 = scmp.lt.s32.totalorder %s17, 0
        %s150 = scalar_select %p149, %s17, 0
        %s151 = smul.addr %s148, 3
        %s152 = sadd.s32 %s150, %s151
        %s153 = smul.addr %s152, 4
        %s154 = scalar_lea.vmem %s0, %s153
      $region28: #{conv_block_forward.3} parent=23 // pred_fallthru
        _
    $region24: #{conv_block_forward.3} parent=5 // pred_fallthru
      _
    %p155 = scmp.le.s32.totalorder 1, %s9
    %p156 = scmp.lt.s32.totalorder %s9, 3
    %p157 = pnand %p155, %p156
    %p158 = pneg %p157
    // Predicated region
    $region29: #{conv_block_forward.3} parent=5 // pred_check
      _
    $region30: #{conv_block_forward.3} parent=5 // pred_check_branch
      %160 = sbr.rel (%p157) target = $region32
    $region31: #{conv_block_forward.3} parent=5 // pred_region
      %s161 = ssub.s32 %s9, 1
      %p162 = scmp.lt.s32.totalorder %s18, 1
      %s163 = scalar_select %p162, %s18, 1
      %p164 = scmp.lt.s32.totalorder %s19, 0
      %s165 = scalar_select %p164, %s19, 0
      %s166 = smul.addr %s163, 3
      %s167 = sadd.s32 %s165, %s166
      %s168 = smul.addr %s167, 4
      %s169 = scalar_lea.vmem %s0, %s168
      %p170 = pneg %p49
      %p171 = pneg %p46
      %p172 = pneg %p70
      %p173 = pneg %p67
      %p174 = pneg %p91
      %p175 = pneg %p88
      %p176 = pneg %p119
      %p177 = pneg %p116
      %p178 = scmp.lt.s32.totalorder %s18, 1
      %s179 = scalar_select %p178, %s18, 1
      %p180 = scmp.lt.s32.totalorder %s19, 0
      %s181 = scalar_select %p180, %s19, 0
      %s182 = sadd.s32 %s181, %s179
      %s183 = smul.addr %s182, 8
      %s184 = scalar_lea.vmem %s3, %s183
      %p185 = scmp.lt.s32.totalorder %s18, 1
      %s186 = scalar_select %p185, %s18, 1
      %p187 = scmp.lt.s32.totalorder %s19, 0
      %s188 = scalar_select %p187, %s19, 0
      %s189 = smul.addr %s186, 3
      %s190 = sadd.s32 %s188, %s189
      %s191 = smul.addr %s190, 4
      %s192 = scalar_lea.vmem %s0, %s191
      %p193 = scmp.lt.s32.totalorder %s18, 1
      %s194 = scalar_select %p193, %s18, 1
      %p195 = scmp.lt.s32.totalorder %s19, 0
      %s196 = scalar_select %p195, %s19, 0
      %s197 = sadd.s32 %s196, %s194
      %s198 = smul.addr %s197, 8
      %s199 = scalar_lea.vmem %s3, %s198
      %v201 = vld [vmem:[%s1] sm:$0xf]
      %v202 = vld [vmem:[%s192] sm:$0xf]
      %v203 = vld [vmem:[%s192 + $0x4] sm:$0xf]
      %v204 = vld [vmem:[%s192 + $0x8] sm:$0xf]
      %v208 = vunpack.c.l.b16 %v202
      %v209 = vunpack.c.l.b16 %v203
      %v210 = vunpack.c.l.b16 %v204
      %v211 = vpack.c.b16 %v209, %v208
      %v212 = vpack.c.b16 %v210, %v210
      %vm214 = vcmask 195584
      %v216 = vsel %vm214, %v201, 0
      %vm218 = vcmask 1043456
      %v220 = vsel %vm218, %v212, 0
      %222 = vmatpush.bf16.msra.mxu0 0
      %223 = vmatpush.bf16.msra.mxu0 0
      %224 = vmatpush.bf16.msra.mxu0 0
      %225 = vmatpush.bf16.msra.mxu0 0
      %226 = vmatpush.bf16.msra.mxu0 0
      %227 = vmatpush.bf16.msra.mxu0 0
      %228 = vmatpush.bf16.msra.mxu0 %v220
      %229 = vmatpush.bf16.msra.mxu0 %v211
      %230 = vmatmul.bf16.gmra.mxu0 %v216
      %v231 = vpop.f32.mrf.mxu0
      %v232 = vadd.f32 0.0, %v231
      %v233 = vpop.f32.mrf.mxu0
      %234 = vdwg.mxu0
      %v235 = vld [vmem:[%s2] sm:$0xff]
      %237 = vset.pattern.permute.xlu0 0
      %238 = vperm.xlu0 %237, %v235
      %v239 = vpop.permute.xlu0 %238
      %v241 = vmul.f32 %v232, %v239
      %242 = vset.pattern.permute.xlu0 1
      %243 = vperm.xlu0 %242, %v235
      %v244 = vpop.permute.xlu0 %243
      %v246 = vadd.f32 %v241, %v244
      %vm247 = vcmp.gt.f32.partialorder %v246, 0.0
      %v248 = vmin.f32 %v246, 0.0
      %v249 = vmul.f32 %v248, 1.442695
      %v250 = vpow.pop %v249
      %v251 = vsub.f32 %v250, 1.0
      %v252 = vsel %vm247, %v246, %v251
      %253 = vst [vmem:[%s199] sm:$0xff] %v252
      %p254 = scmp.lt.s32.totalorder %s18, 1
      %s255 = scalar_select %p254, %s18, 1
      %p256 = scmp.lt.s32.totalorder %s19, 0
      %s257 = scalar_select %p256, %s19, 0
      %s258 = sadd.s32 %s257, %s255
      %s259 = smul.addr %s258, 8
      %s260 = scalar_lea.vmem %s3, %s259
      // Predicated region
      $region33: #{conv_block_forward.3} parent=31 // pred_check
        %p261 = pneg %p116
      $region34: #{conv_block_forward.3} parent=31 // pred_check_branch
        %263 = sbr.rel (%p261) target = $region36
      $region35: #{conv_block_forward.3} parent=31 // pred_region
        _
      $region36: #{conv_block_forward.3} parent=31 // pred_fallthru
        _
    $region32: #{conv_block_forward.3} parent=5 // pred_fallthru
      _
    %p264 = scmp.le.s32.totalorder 2, %s9
    // Predicated region
    $region37: #{conv_block_forward.3} parent=5 // pred_check
      %p265 = pneg %p264
    $region38: #{conv_block_forward.3} parent=5 // pred_check_branch
      %267 = sbr.rel (%p265) target = $region40
    $region39: #{conv_block_forward.3} parent=5 // pred_region
      %s268 = ssub.s32 %s9, 2
      // Predicated region
      $region41: #{conv_block_forward.3} parent=39 // pred_check
        %p269 = pneg %p122
      $region42: #{conv_block_forward.3} parent=39 // pred_check_branch
        %271 = sbr.rel (%p269) target = $region44
      $region43: #{conv_block_forward.3} parent=39 // pred_region
        %p272 = scmp.lt.s32.totalorder %s20, 1
        %s273 = scalar_select %p272, %s20, 1
        %p274 = scmp.lt.s32.totalorder %s21, 0
        %s275 = scalar_select %p274, %s21, 0
        %s276 = sadd.s32 %s275, %s273
        %s277 = smul.addr %s276, 8
        %s278 = scalar_lea.vmem %s3, %s277
      $region44: #{conv_block_forward.3} parent=39 // pred_fallthru
        _
    $region40: #{conv_block_forward.3} parent=5 // pred_fallthru
      _
  $region6: #{conv_block_forward.3} parent=0 // loop_footer
    %s13 = sadd.s32 1, %s9
  $region7: #{conv_block_forward.3} parent=0 // loop_footer_branch
    %8 = sbr.rel target = $region3
  $region8: #{conv_block_forward.3} parent=0 // loop_exit
    _

</llo_original>
